<compile_context>
chip_gen: v5e
topology: v5e:2x2
jax: 0.10.0
libtpu: 0.0.40
codegen_flags: <defaults>
</compile_context>

<pallas_src>
import math

import jax
import jax.numpy as jnp
import numpy as np
from jax.experimental import pallas as pl
from jax.experimental.pallas import tpu as pltpu

WIN = 11          # SSIM gaussian window size
SIGMA = 1.5       # SSIM gaussian sigma
PAD = WIN // 2
C1 = 0.01 ** 2
C2 = 0.03 ** 2

# Set to jnp.bfloat16 on v5e/v6e for ~2-3x MXU throughput (accumulation stays
# f32 via preferred_element_type); left at f32 to preserve exact f32 semantics.
MATMUL_DTYPE = jnp.float32


def _gaussian_1d(win, sigma):
    g = np.array(
        [math.exp(-((x - win // 2) ** 2) / (2.0 * sigma ** 2)) for x in range(win)],
        dtype=np.float64,
    )
    return g / g.sum()


def _band(n, taps):
    """Symmetric truncated band matrix: M[i, j] = taps[j - i + r] inside the band.

    M @ x  (equivalently x @ M, taps are symmetric) is exactly the 'same' 1-D
    correlation of x with `taps` using zero padding -- the padding is folded in.
    """
    r = len(taps) // 2
    m = np.zeros((n, n), dtype=np.float64)
    for i in range(n):
        for j in range(max(0, i - r), min(n, i + r + 1)):
            m[i, j] = taps[j - i + r]
    return m


def _loss_kernel(p_ref, g_ref, gh5_ref, gwc_ref, qp_ref, out_ref):
    # One grid step == one image; pixel data is the raw NHWC bytes viewed (H, W*C).
    p = p_ref[0]                       # (H, W*C) f32
    g = g_ref[0]
    hh = p.shape[0]
    mm = MATMUL_DTYPE

    # ---------------- L1 partial sum ----------------
    l1_sum = jnp.sum(jnp.abs(p - g))

    # ---------------- SSIM partial sum ----------------
    # Stack the five conv operands along rows -> single separable-conv pass:
    #   W-direction gaussian:  stack @ kron(gw_band, I_C)      (one 2D matmul)
    #   H-direction gaussian:  kron(I_5, gh_band) @ (...)      (one 2D matmul)
    # Zero padding is already inside the truncated band matrices.
    stack = jnp.concatenate([p, g, p * p, g * g, p * g], axis=0)        # (5H, WC)
    zw = jnp.dot(stack.astype(mm), gwc_ref[...],
                 preferred_element_type=jnp.float32)                    # (5H, WC)
    z = jnp.dot(gh5_ref[...], zw.astype(mm),
                preferred_element_type=jnp.float32)                     # (5H, WC)
    mu1 = z[0 * hh:1 * hh]
    mu2 = z[1 * hh:2 * hh]
    e11 = z[2 * hh:3 * hh]
    e22 = z[3 * hh:4 * hh]
    e12 = z[4 * hh:5 * hh]
    mu1_sq = mu1 * mu1
    mu2_sq = mu2 * mu2
    mu12 = mu1 * mu2
    s1 = e11 - mu1_sq                 # E[x^2] - mu^2 (pad is zero, so exact)
    s2 = e22 - mu2_sq
    s12 = e12 - mu12
    num = (2.0 * mu12 + C1) * (2.0 * s12 + C2)
    den = (mu1_sq + mu2_sq + C1) * (s1 + s2 + C2)
    # EUP reciprocal instead of a full-tensor VALU divide.
    ssim_sum = jnp.sum(num * pl.reciprocal(den, approx=True))

    # ---------------- contrast partial sum ----------------
    # F.avg_pool2d(x_nhwc, 3, 1, 1) pools over the (W, C) dims, divisor always 9.
    #   x - pool(x) == x @ (I - kron(tri_W, tri_C) / 9)   (one lane-dense matmul)
    pg = jnp.concatenate([p, g], axis=0)                                # (2H, WC)
    ct = jnp.abs(jnp.dot(pg.astype(mm), qp_ref[...],
                         preferred_element_type=jnp.float32))           # (2H, WC)
    dc = ct[:hh] - ct[hh:]
    c_sum = jnp.sum(dc * dc)

    # Lane-dense partial-sum output (full 128-lane rows, no masked stores).
    out_ref[0, 0] = jnp.full((8, 128), l1_sum, jnp.float32)
    out_ref[0, 1] = jnp.full((8, 128), ssim_sum, jnp.float32)
    out_ref[0, 2] = jnp.full((8, 128), c_sum, jnp.float32)


def multi_contrast_loss(pred, gt):
    """pred, gt: (N, H, W, C) float32. Returns scalar loss."""
    n, h, w, c = pred.shape
    wc = w * c

    # -------- deterministic operators (built once, tiny) --------
    g1d = _gaussian_1d(WIN, SIGMA)
    gh = _band(h, g1d)                                   # (H, H)   H-dir gaussian
    gw = _band(w, g1d)                                   # (W, W)   W-dir gaussian
    gh5 = np.kron(np.eye(5), gh)                         # (5H, 5H) block-diag for the 5-stack
    gwc = np.kron(gw, np.eye(c))                         # (WC, WC) W-dir gaussian, C passthrough
    ones3 = np.ones(3, dtype=np.float64)
    pool_wc = np.kron(_band(w, ones3), _band(c, ones3))  # (WC, WC) 3x3 neighbourhood over (W, C)
    qp = np.eye(wc) - pool_wc / 9.0                      # x @ qp == x - avg_pool3x3_{W,C}(x)

    gh5 = jnp.asarray(gh5, dtype=MATMUL_DTYPE)
    gwc = jnp.asarray(gwc, dtype=MATMUL_DTYPE)
    qp = jnp.asarray(qp, dtype=MATMUL_DTYPE)

    # Single copy of the pixel data, lane-dense view (free reshape, no transpose).
    pred2 = pred.reshape(n, h, wc)
    gt2 = gt.reshape(n, h, wc)

    parts = pl.pallas_call(
        _loss_kernel,
        out_shape=jax.ShapeDtypeStruct((n, 3, 8, 128), jnp.float32),
        grid_spec=pltpu.PrefetchScalarGridSpec(
            num_scalar_prefetch=0,
            grid=(n,),
            in_specs=[
                pl.BlockSpec((1, h, wc), lambda i: (i, 0, 0)),
                pl.BlockSpec((1, h, wc), lambda i: (i, 0, 0)),
                pl.BlockSpec((5 * h, 5 * h), lambda i: (0, 0)),
                pl.BlockSpec((wc, wc), lambda i: (0, 0)),
                pl.BlockSpec((wc, wc), lambda i: (0, 0)),
            ],
            out_specs=pl.BlockSpec((1, 3, 8, 128), lambda i: (i, 0, 0, 0)),
        ),
        compiler_params=pltpu.CompilerParams(
            dimension_semantics=("parallel",),
        ),
    )(pred2, gt2, gh5, gwc, qp)

    # Tiny cross-image reduction of the per-tile partial sums (per the review,
    # done outside the kernel so the batch grid axis stays parallel).
    sums = jnp.sum(parts[:, :, 0, 0], axis=0)            # (3,)
    denom = jnp.float32(n * h * w * c)
    l1 = sums[0] / denom
    ssim_term = 1.0 - sums[1] / denom
    contrast_loss = sums[2] / denom
    return l1 + ssim_term + 0.5 * contrast_loss


if __name__ == "__main__":
    key = jax.random.PRNGKey(0)
    k1, k2 = jax.random.split(key)
    N, H, W, C = 2, 16, 16, 4
    pred = jax.random.uniform(k1, (N, H, W, C), dtype=jnp.float32)
    gt = jax.random.uniform(k2, (N, H, W, C), dtype=jnp.float32)
    loss = jax.jit(multi_contrast_loss)(pred, gt)
    jax.block_until_ready(loss)
    print("KERNEL_OK")
</pallas_src>

<mosaic_0001>
module attributes {stable_mosaic.version = 11 : i64} {
  func.func @_loss_kernel(%arg0: i32, %arg1: memref<1x16x64xf32, #tpu.memory_space<vmem>>, %arg2: memref<1x16x64xf32, #tpu.memory_space<vmem>>, %arg3: memref<80x80xf32, #tpu.memory_space<vmem>>, %arg4: memref<64x64xf32, #tpu.memory_space<vmem>>, %arg5: memref<64x64xf32, #tpu.memory_space<vmem>>, %arg6: memref<1x3x8x128xf32, #tpu.memory_space<vmem>>) attributes {dimension_semantics = [#tpu.dimension_semantics<parallel>], iteration_bounds = array<i64: 2>, scalar_prefetch = 0 : i64, scratch_operands = 0 : i64, tpu.core_type = #tpu.core_type<tc>, window_params = [{transform_indices = @transform_0, window_bounds = array<i64: 1, 16, 64>}, {transform_indices = @transform_1, window_bounds = array<i64: 1, 16, 64>}, {pipeline_mode = #tpu.pipeline_mode<synchronous>, transform_indices = @transform_2, window_bounds = array<i64: 80, 80>}, {pipeline_mode = #tpu.pipeline_mode<synchronous>, transform_indices = @transform_3, window_bounds = array<i64: 64, 64>}, {pipeline_mode = #tpu.pipeline_mode<synchronous>, transform_indices = @transform_4, window_bounds = array<i64: 64, 64>}, {transform_indices = @transform_5, window_bounds = array<i64: 1, 3, 8, 128>}]} {
    %c0 = arith.constant 0 : index
    %c0_0 = arith.constant 0 : index
    %c0_1 = arith.constant 0 : index
    %0 = vector.load %arg1[%c0, %c0_0, %c0_1] : memref<1x16x64xf32, #tpu.memory_space<vmem>>, vector<1x16x64xf32>
    %1 = vector.shape_cast %0 : vector<1x16x64xf32> to vector<16x64xf32>
    %c0_2 = arith.constant 0 : index
    %c0_3 = arith.constant 0 : index
    %c0_4 = arith.constant 0 : index
    %2 = vector.load %arg2[%c0_2, %c0_3, %c0_4] : memref<1x16x64xf32, #tpu.memory_space<vmem>>, vector<1x16x64xf32>
    %3 = vector.shape_cast %2 : vector<1x16x64xf32> to vector<16x64xf32>
    %4 = arith.subf %1, %3 : vector<16x64xf32>
    %5 = math.absf %4 : vector<16x64xf32>
    %6 = vector.shape_cast %5 : vector<16x64xf32> to vector<1x16x64xf32>
    %cst = arith.constant dense<0.000000e+00> : vector<1xf32>
    %7 = vector.multi_reduction <add>, %6, %cst [1, 2] : vector<1x16x64xf32> to vector<1xf32>
    %8 = vector.shape_cast %7 : vector<1xf32> to vector<1x1x1xf32>
    %9 = vector.extract %8[0, 0, 0] : f32 from vector<1x1x1xf32>
    %10 = arith.mulf %1, %1 : vector<16x64xf32>
    %11 = arith.mulf %3, %3 : vector<16x64xf32>
    %12 = arith.mulf %1, %3 : vector<16x64xf32>
    %13 = tpu.concatenate %1, %3, %10, %11, %12 in 0 : vector<16x64xf32>, vector<16x64xf32>, vector<16x64xf32>, vector<16x64xf32>, vector<16x64xf32> -> vector<80x64xf32>
    %c0_5 = arith.constant 0 : index
    %c0_6 = arith.constant 0 : index
    %14 = vector.load %arg4[%c0_5, %c0_6] : memref<64x64xf32, #tpu.memory_space<vmem>>, vector<64x64xf32>
    %cst_7 = arith.constant dense<0.000000e+00> : vector<80x64xf32>
    %15 = tpu.matmul %13, %14, %cst_7 {dimension_numbers = #tpu.dot_dimension_numbers<[1], [0], [0], [1], [0, 0, 1, 1], [], []>} : vector<80x64xf32>, vector<64x64xf32>, vector<80x64xf32> -> vector<80x64xf32>
    %c0_8 = arith.constant 0 : index
    %c0_9 = arith.constant 0 : index
    %16 = vector.load %arg3[%c0_8, %c0_9] : memref<80x80xf32, #tpu.memory_space<vmem>>, vector<80x80xf32>
    %cst_10 = arith.constant dense<0.000000e+00> : vector<80x64xf32>
    %17 = tpu.matmul %16, %15, %cst_10 {dimension_numbers = #tpu.dot_dimension_numbers<[1], [0], [0], [1], [0, 0, 1, 1], [], []>} : vector<80x80xf32>, vector<80x64xf32>, vector<80x64xf32> -> vector<80x64xf32>
    %18 = vector.extract_strided_slice %17 {offsets = [0, 0], sizes = [16, 64], strides = [1, 1]} : vector<80x64xf32> to vector<16x64xf32>
    %19 = vector.extract_strided_slice %17 {offsets = [16, 0], sizes = [16, 64], strides = [1, 1]} : vector<80x64xf32> to vector<16x64xf32>
    %20 = vector.extract_strided_slice %17 {offsets = [32, 0], sizes = [16, 64], strides = [1, 1]} : vector<80x64xf32> to vector<16x64xf32>
    %21 = vector.extract_strided_slice %17 {offsets = [48, 0], sizes = [16, 64], strides = [1, 1]} : vector<80x64xf32> to vector<16x64xf32>
    %22 = vector.extract_strided_slice %17 {offsets = [64, 0], sizes = [16, 64], strides = [1, 1]} : vector<80x64xf32> to vector<16x64xf32>
    %23 = arith.mulf %18, %18 : vector<16x64xf32>
    %24 = arith.mulf %19, %19 : vector<16x64xf32>
    %25 = arith.mulf %18, %19 : vector<16x64xf32>
    %26 = arith.subf %20, %23 : vector<16x64xf32>
    %27 = arith.subf %21, %24 : vector<16x64xf32>
    %28 = arith.subf %22, %25 : vector<16x64xf32>
    %cst_11 = arith.constant 2.000000e+00 : f32
    %29 = vector.broadcast %cst_11 : f32 to vector<16x64xf32>
    %30 = arith.mulf %29, %25 : vector<16x64xf32>
    %cst_12 = arith.constant 9.99999974E-5 : f32
    %31 = vector.broadcast %cst_12 : f32 to vector<16x64xf32>
    %32 = arith.addf %30, %31 : vector<16x64xf32>
    %cst_13 = arith.constant 2.000000e+00 : f32
    %33 = vector.broadcast %cst_13 : f32 to vector<16x64xf32>
    %34 = arith.mulf %33, %28 : vector<16x64xf32>
    %cst_14 = arith.constant 8.99999984E-4 : f32
    %35 = vector.broadcast %cst_14 : f32 to vector<16x64xf32>
    %36 = arith.addf %34, %35 : vector<16x64xf32>
    %37 = arith.mulf %32, %36 : vector<16x64xf32>
    %38 = arith.addf %23, %24 : vector<16x64xf32>
    %cst_15 = arith.constant 9.99999974E-5 : f32
    %39 = vector.broadcast %cst_15 : f32 to vector<16x64xf32>
    %40 = arith.addf %38, %39 : vector<16x64xf32>
    %41 = arith.addf %26, %27 : vector<16x64xf32>
    %cst_16 = arith.constant 8.99999984E-4 : f32
    %42 = vector.broadcast %cst_16 : f32 to vector<16x64xf32>
    %43 = arith.addf %41, %42 : vector<16x64xf32>
    %44 = arith.mulf %40, %43 : vector<16x64xf32>
    %45 = tpu.reciprocal %44 {approx = true} : vector<16x64xf32> -> vector<16x64xf32>
    %46 = arith.mulf %37, %45 : vector<16x64xf32>
    %47 = vector.shape_cast %46 : vector<16x64xf32> to vector<1x16x64xf32>
    %cst_17 = arith.constant dense<0.000000e+00> : vector<1xf32>
    %48 = vector.multi_reduction <add>, %47, %cst_17 [1, 2] : vector<1x16x64xf32> to vector<1xf32>
    %49 = vector.shape_cast %48 : vector<1xf32> to vector<1x1x1xf32>
    %50 = vector.extract %49[0, 0, 0] : f32 from vector<1x1x1xf32>
    %51 = tpu.concatenate %1, %3 in 0 : vector<16x64xf32>, vector<16x64xf32> -> vector<32x64xf32>
    %c0_18 = arith.constant 0 : index
    %c0_19 = arith.constant 0 : index
    %52 = vector.load %arg5[%c0_18, %c0_19] : memref<64x64xf32, #tpu.memory_space<vmem>>, vector<64x64xf32>
    %cst_20 = arith.constant dense<0.000000e+00> : vector<32x64xf32>
    %53 = tpu.matmul %51, %52, %cst_20 {dimension_numbers = #tpu.dot_dimension_numbers<[1], [0], [0], [1], [0, 0, 1, 1], [], []>} : vector<32x64xf32>, vector<64x64xf32>, vector<32x64xf32> -> vector<32x64xf32>
    %54 = math.absf %53 : vector<32x64xf32>
    %55 = vector.extract_strided_slice %54 {offsets = [0, 0], sizes = [16, 64], strides = [1, 1]} : vector<32x64xf32> to vector<16x64xf32>
    %56 = vector.extract_strided_slice %54 {offsets = [16, 0], sizes = [16, 64], strides = [1, 1]} : vector<32x64xf32> to vector<16x64xf32>
    %57 = arith.subf %55, %56 : vector<16x64xf32>
    %58 = arith.mulf %57, %57 : vector<16x64xf32>
    %59 = vector.shape_cast %58 : vector<16x64xf32> to vector<1x16x64xf32>
    %cst_21 = arith.constant dense<0.000000e+00> : vector<1xf32>
    %60 = vector.multi_reduction <add>, %59, %cst_21 [1, 2] : vector<1x16x64xf32> to vector<1xf32>
    %61 = vector.shape_cast %60 : vector<1xf32> to vector<1x1x1xf32>
    %62 = vector.extract %61[0, 0, 0] : f32 from vector<1x1x1xf32>
    %63 = vector.broadcast %9 : f32 to vector<8x128xf32>
    %c0_22 = arith.constant 0 : index
    %c0_23 = arith.constant 0 : index
    %c0_24 = arith.constant 0 : index
    %c0_25 = arith.constant 0 : index
    %64 = vector.load %arg6[%c0_22, %c0_23, %c0_24, %c0_25] : memref<1x3x8x128xf32, #tpu.memory_space<vmem>>, vector<1x1x8x128xf32>
    %65 = vector.shape_cast %64 : vector<1x1x8x128xf32> to vector<8x128xf32>
    %66 = vector.shape_cast %63 : vector<8x128xf32> to vector<1x1x8x128xf32>
    tpu.vector_store %arg6[%c0_22, %c0_23, %c0_24, %c0_25], %66 {strides = array<i32>} : memref<1x3x8x128xf32, #tpu.memory_space<vmem>>, vector<1x1x8x128xf32>,
    %67 = vector.broadcast %50 : f32 to vector<8x128xf32>
    %c0_26 = arith.constant 0 : index
    %c1 = arith.constant 1 : index
    %c0_27 = arith.constant 0 : index
    %c0_28 = arith.constant 0 : index
    %68 = vector.load %arg6[%c0_26, %c1, %c0_27, %c0_28] : memref<1x3x8x128xf32, #tpu.memory_space<vmem>>, vector<1x1x8x128xf32>
    %69 = vector.shape_cast %68 : vector<1x1x8x128xf32> to vector<8x128xf32>
    %70 = vector.shape_cast %67 : vector<8x128xf32> to vector<1x1x8x128xf32>
    tpu.vector_store %arg6[%c0_26, %c1, %c0_27, %c0_28], %70 {strides = array<i32>} : memref<1x3x8x128xf32, #tpu.memory_space<vmem>>, vector<1x1x8x128xf32>,
    %71 = vector.broadcast %62 : f32 to vector<8x128xf32>
    %c0_29 = arith.constant 0 : index
    %c2 = arith.constant 2 : index
    %c0_30 = arith.constant 0 : index
    %c0_31 = arith.constant 0 : index
    %72 = vector.load %arg6[%c0_29, %c2, %c0_30, %c0_31] : memref<1x3x8x128xf32, #tpu.memory_space<vmem>>, vector<1x1x8x128xf32>
    %73 = vector.shape_cast %72 : vector<1x1x8x128xf32> to vector<8x128xf32>
    %74 = vector.shape_cast %71 : vector<8x128xf32> to vector<1x1x8x128xf32>
    tpu.vector_store %arg6[%c0_29, %c2, %c0_30, %c0_31], %74 {strides = array<i32>} : memref<1x3x8x128xf32, #tpu.memory_space<vmem>>, vector<1x1x8x128xf32>,
    return
  }
  func.func @transform_0(%arg0: i32) -> (i32, i32, i32) {
    %c0_i32 = arith.constant 0 : i32
    %c0_i32_0 = arith.constant 0 : i32
    %c0_i32_1 = arith.constant 0 : i32
    return %arg0, %c0_i32, %c0_i32_0 : i32, i32, i32
  }
  func.func @transform_1(%arg0: i32) -> (i32, i32, i32) {
    %c0_i32 = arith.constant 0 : i32
    %c0_i32_0 = arith.constant 0 : i32
    %c0_i32_1 = arith.constant 0 : i32
    return %arg0, %c0_i32, %c0_i32_0 : i32, i32, i32
  }
  func.func @transform_2(%arg0: i32) -> (i32, i32) {
    %c0_i32 = arith.constant 0 : i32
    %c0_i32_0 = arith.constant 0 : i32
    %c0_i32_1 = arith.constant 0 : i32
    return %c0_i32, %c0_i32_0 : i32, i32
  }
  func.func @transform_3(%arg0: i32) -> (i32, i32) {
    %c0_i32 = arith.constant 0 : i32
    %c0_i32_0 = arith.constant 0 : i32
    %c0_i32_1 = arith.constant 0 : i32
    return %c0_i32, %c0_i32_0 : i32, i32
  }
  func.func @transform_4(%arg0: i32) -> (i32, i32) {
    %c0_i32 = arith.constant 0 : i32
    %c0_i32_0 = arith.constant 0 : i32
    %c0_i32_1 = arith.constant 0 : i32
    return %c0_i32, %c0_i32_0 : i32, i32
  }
  func.func @transform_5(%arg0: i32) -> (i32, i32, i32, i32) {
    %c0_i32 = arith.constant 0 : i32
    %c0_i32_0 = arith.constant 0 : i32
    %c0_i32_1 = arith.constant 0 : i32
    %c0_i32_2 = arith.constant 0 : i32
    return %arg0, %c0_i32, %c0_i32_0, %c0_i32_1 : i32, i32, i32, i32
  }
}

</mosaic_0001>

<llo_original>
// kernel: multi_contrast_loss.1
$region0: #{multi_contrast_loss.1}
  #allocation0 [shape = 'u32[]', space=smem, size = 0x4, offset = 0x4, fixed_abs, tag = 'smem constant byte address 0x4 - core index']
  #allocation1 [shape = 'u32[72,128]{1,0:T(1,128)}', space=vmem, size = 0x9000, scoped, tag = 'internal scratch']
  %s0 = inlined_call_operand.vmem [shape: f32[2,16,64], index: 0, kind: input, shape index: {}]
  %s1 = inlined_call_operand.vmem [shape: f32[2,16,64], index: 1, kind: input, shape index: {}]
  %s2 = inlined_call_operand.vmem [shape: f32[80,80], index: 2, kind: input, shape index: {}]
  %s3 = inlined_call_operand.vmem [shape: f32[64,64], index: 3, kind: input, shape index: {}]
  %s4 = inlined_call_operand.vmem [shape: f32[64,64], index: 4, kind: input, shape index: {}]
  %s5 = inlined_call_operand.vmem [shape: f32[2,3,8,128], index: 5, kind: output, shape index: {}]
  %s6 = sld [smem:[#allocation0]]
  $region53: #{multi_contrast_loss.1} parent=0
    _
  %s8 = ssub.s32 1, %s6
  %s9 = scalar_select 0, %s8, %s6
  loop: start=0, step=1, limit=4
  $region2: #{multi_contrast_loss.1} parent=0 // loop_pre_header
    _
  $region3: #{multi_contrast_loss.1} parent=0 // loop_header
    %s11 = sphi 0, %s15
    %p12 = scmp.ge.s32.totalorder %s11, 4
    %s21 = sphi 0, %s23
    %s24 = sphi 0, %s21
    %s25 = sphi 0, %s24
    %s41 = sphi 0, %s25
    %s47 = sphi 0, %s49
    %s50 = sphi 0, %s47
    %s51 = sphi 0, %s50
    %s67 = sphi 0, %s51
    %s71 = sphi 0, %s71
    %s73 = sphi 0, %s71
    %s74 = sphi 0, %s73
    %s88 = sphi 0, %s74
    %s92 = sphi 0, %s92
    %s94 = sphi 0, %s92
    %s95 = sphi 0, %s94
    %s109 = sphi 0, %s95
    %s113 = sphi 0, %s113
    %s115 = sphi 0, %s113
    %s116 = sphi 0, %s115
    %s130 = sphi 0, %s116
    %s136 = sphi 0, %s138
    %s139 = sphi 0, %s136
    %s140 = sphi 0, %s139
    %s156 = sphi 0, %s140
  $region4: #{multi_contrast_loss.1} parent=0 // loop_header_branch
    %14 = sbr.rel (%p12) target = $region8
  $region5: #{multi_contrast_loss.1} parent=0 // loop_body
    %s16 = ssub.s32 %s11, 1
    %s17 = ssub.s32 %s11, 2
    %s18 = sadd.s32 %s11, 1
    %s19 = ssub.s32 %s11, %s18
    %p20 = scmp.eq.s32.totalorder %s19, 0
    %s22 = sadd.s32 %s21, 1
    %s23 = scalar_select %p20, %s21, %s22
    %p26 = pneg %p20
    %p27 = scmp.eq.s32.totalorder %s11, 1
    %p28 = por %p26, %p27
    %p29 = scmp.ne.s32.totalorder %s21, %s24
    %p30 = scmp.eq.s32.totalorder %s11, 0
    %p31 = por %p29, %p30
    %p32 = scmp.ne.s32.totalorder %s21, %s24
    %p33 = scmp.eq.s32.totalorder %s16, 1
    %p34 = por %p32, %p33
    %p35 = scmp.ne.s32.totalorder %s24, %s25
    %p36 = scmp.eq.s32.totalorder %s16, 0
    %p37 = por %p35, %p36
    %p38 = scmp.ne.s32.totalorder %s24, %s25
    %p39 = scmp.eq.s32.totalorder %s17, 1
    %p40 = por %p38, %p39
    %p42 = scmp.ne.s32.totalorder %s25, %s41
    %p43 = scmp.eq.s32.totalorder %s17, 0
    %p44 = por %p42, %p43
    %s45 = ssub.s32 %s11, %s18
    %p46 = scmp.eq.s32.totalorder %s45, 0
    %s48 = sadd.s32 %s47, 1
    %s49 = scalar_select %p46, %s47, %s48
    %p52 = pneg %p46
    %p53 = scmp.eq.s32.totalorder %s11, 1
    %p54 = por %p52, %p53
    %p55 = scmp.ne.s32.totalorder %s47, %s50
    %p56 = scmp.eq.s32.totalorder %s11, 0
    %p57 = por %p55, %p56
    %p58 = scmp.ne.s32.totalorder %s47, %s50
    %p59 = scmp.eq.s32.totalorder %s16, 1
    %p60 = por %p58, %p59
    %p61 = scmp.ne.s32.totalorder %s50, %s51
    %p62 = scmp.eq.s32.totalorder %s16, 0
    %p63 = por %p61, %p62
    %p64 = scmp.ne.s32.totalorder %s50, %s51
    %p65 = scmp.eq.s32.totalorder %s17, 1
    %p66 = por %p64, %p65
    %p68 = scmp.ne.s32.totalorder %s51, %s67
    %p69 = scmp.eq.s32.totalorder %s17, 0
    %p70 = por %p68, %p69
    %s72 = sadd.s32 %s71, 1
    %p75 = scmp.eq.s32.totalorder %s11, 1
    %p76 = scmp.ne.s32.totalorder %s71, %s73
    %p77 = scmp.eq.s32.totalorder %s11, 0
    %p78 = por %p76, %p77
    %p79 = scmp.ne.s32.totalorder %s71, %s73
    %p80 = scmp.eq.s32.totalorder %s16, 1
    %p81 = por %p79, %p80
    %p82 = scmp.ne.s32.totalorder %s73, %s74
    %p83 = scmp.eq.s32.totalorder %s16, 0
    %p84 = por %p82, %p83
    %p85 = scmp.ne.s32.totalorder %s73, %s74
    %p86 = scmp.eq.s32.totalorder %s17, 1
    %p87 = por %p85, %p86
    %p89 = scmp.ne.s32.totalorder %s74, %s88
    %p90 = scmp.eq.s32.totalorder %s17, 0
    %p91 = por %p89, %p90
    %s93 = sadd.s32 %s92, 1
    %p96 = scmp.eq.s32.totalorder %s11, 1
    %p97 = scmp.ne.s32.totalorder %s92, %s94
    %p98 = scmp.eq.s32.totalorder %s11, 0
    %p99 = por %p97, %p98
    %p100 = scmp.ne.s32.totalorder %s92, %s94
    %p101 = scmp.eq.s32.totalorder %s16, 1
    %p102 = por %p100, %p101
    %p103 = scmp.ne.s32.totalorder %s94, %s95
    %p104 = scmp.eq.s32.totalorder %s16, 0
    %p105 = por %p103, %p104
    %p106 = scmp.ne.s32.totalorder %s94, %s95
    %p107 = scmp.eq.s32.totalorder %s17, 1
    %p108 = por %p106, %p107
    %p110 = scmp.ne.s32.totalorder %s95, %s109
    %p111 = scmp.eq.s32.totalorder %s17, 0
    %p112 = por %p110, %p111
    %s114 = sadd.s32 %s113, 1
    %p117 = scmp.eq.s32.totalorder %s11, 1
    %p118 = scmp.ne.s32.totalorder %s113, %s115
    %p119 = scmp.eq.s32.totalorder %s11, 0
    %p120 = por %p118, %p119
    %p121 = scmp.ne.s32.totalorder %s113, %s115
    %p122 = scmp.eq.s32.totalorder %s16, 1
    %p123 = por %p121, %p122
    %p124 = scmp.ne.s32.totalorder %s115, %s116
    %p125 = scmp.eq.s32.totalorder %s16, 0
    %p126 = por %p124, %p125
    %p127 = scmp.ne.s32.totalorder %s115, %s116
    %p128 = scmp.eq.s32.totalorder %s17, 1
    %p129 = por %p127, %p128
    %p131 = scmp.ne.s32.totalorder %s116, %s130
    %p132 = scmp.eq.s32.totalorder %s17, 0
    %p133 = por %p131, %p132
    %s134 = ssub.s32 %s11, %s18
    %p135 = scmp.eq.s32.totalorder %s134, 0
    %s137 = sadd.s32 %s136, 1
    %s138 = scalar_select %p135, %s136, %s137
    %p141 = pneg %p135
    %p142 = scmp.eq.s32.totalorder %s11, 1
    %p143 = por %p141, %p142
    %p144 = scmp.ne.s32.totalorder %s136, %s139
    %p145 = scmp.eq.s32.totalorder %s11, 0
    %p146 = por %p144, %p145
    %p147 = scmp.ne.s32.totalorder %s136, %s139
    %p148 = scmp.eq.s32.totalorder %s16, 1
    %p149 = por %p147, %p148
    %p150 = scmp.ne.s32.totalorder %s139, %s140
    %p151 = scmp.eq.s32.totalorder %s16, 0
    %p152 = por %p150, %p151
    %p153 = scmp.ne.s32.totalorder %s139, %s140
    %p154 = scmp.eq.s32.totalorder %s17, 1
    %p155 = por %p153, %p154
    %p157 = scmp.ne.s32.totalorder %s140, %s156
    %p158 = scmp.eq.s32.totalorder %s17, 0
    %p159 = por %p157, %p158
    %p160 = scmp.le.s32.totalorder 1, %s11
    %p161 = scmp.lt.s32.totalorder %s11, 3
    %p162 = pnand %p160, %p161
    %p163 = pneg %p162
    // Predicated region
    $region9: #{multi_contrast_loss.1} parent=5 // pred_check
      _
    $region10: #{multi_contrast_loss.1} parent=5 // pred_check_branch
      %165 = sbr.rel (%p162) target = $region12
    $region11: #{multi_contrast_loss.1} parent=5 // pred_region
      %s166 = ssub.s32 %s11, 1
      // Predicated region
      $region13: #{multi_contrast_loss.1} parent=11 // pred_check
        %p167 = pneg %p84
      $region14: #{multi_contrast_loss.1} parent=11 // pred_check_branch
        %169 = sbr.rel (%p167) target = $region16
      $region15: #{multi_contrast_loss.1} parent=11 // pred_region
        _
      $region16: #{multi_contrast_loss.1} parent=11 // pred_fallthru
        _
      // Predicated region
      $region17: #{multi_contrast_loss.1} parent=11 // pred_check
        %p170 = pneg %p105
      $region18: #{multi_contrast_loss.1} parent=11 // pred_check_branch
        %172 = sbr.rel (%p170) target = $region20
      $region19: #{multi_contrast_loss.1} parent=11 // pred_region
        _
      $region20: #{multi_contrast_loss.1} parent=11 // pred_fallthru
        _
      // Predicated region
      $region21: #{multi_contrast_loss.1} parent=11 // pred_check
        %p173 = pneg %p126
      $region22: #{multi_contrast_loss.1} parent=11 // pred_check_branch
        %175 = sbr.rel (%p173) target = $region24
      $region23: #{multi_contrast_loss.1} parent=11 // pred_region
        _
      $region24: #{multi_contrast_loss.1} parent=11 // pred_fallthru
        _
    $region12: #{multi_contrast_loss.1} parent=5 // pred_fallthru
      _
    %p176 = scmp.lt.s32.totalorder %s11, 2
    // Predicated region
    $region25: #{multi_contrast_loss.1} parent=5 // pred_check
      %p177 = pneg %p176
    $region26: #{multi_contrast_loss.1} parent=5 // pred_check_branch
      %179 = sbr.rel (%p177) target = $region28
    $region27: #{multi_contrast_loss.1} parent=5 // pred_region
      // Predicated region
      $region29: #{multi_contrast_loss.1} parent=27 // pred_check
        %p180 = pneg %p31
      $region30: #{multi_contrast_loss.1} parent=27 // pred_check_branch
        %182 = sbr.rel (%p180) target = $region32
      $region31: #{multi_contrast_loss.1} parent=27 // pred_region
        %p183 = scmp.lt.s32.totalorder %s11, 1
        %s184 = scalar_select %p183, %s11, 1
        %s185 = smul.addr %s184, 2
        %s186 = smul.addr %s185, 8
        %s187 = scalar_lea.vmem %s0, %s186
      $region32: #{multi_contrast_loss.1} parent=27 // pred_fallthru
        _
      // Predicated region
      $region33: #{multi_contrast_loss.1} parent=27 // pred_check
        %p188 = pneg %p57
      $region34: #{multi_contrast_loss.1} parent=27 // pred_check_branch
        %190 = sbr.rel (%p188) target = $region36
      $region35: #{multi_contrast_loss.1} parent=27 // pred_region
        %p191 = scmp.lt.s32.totalorder %s11, 1
        %s192 = scalar_select %p191, %s11, 1
        %s193 = smul.addr %s192, 2
        %s194 = smul.addr %s193, 8
        %s195 = scalar_lea.vmem %s1, %s194
      $region36: #{multi_contrast_loss.1} parent=27 // pred_fallthru
        _
    $region28: #{multi_contrast_loss.1} parent=5 // pred_fallthru
      _
    %p196 = scmp.le.s32.totalorder 1, %s11
    %p197 = scmp.lt.s32.totalorder %s11, 3
    %p198 = pnand %p196, %p197
    %p199 = pneg %p198
    // Predicated region
    $region37: #{multi_contrast_loss.1} parent=5 // pred_check
      _
    $region38: #{multi_contrast_loss.1} parent=5 // pred_check_branch
      %201 = sbr.rel (%p198) target = $region40
    $region39: #{multi_contrast_loss.1} parent=5 // pred_region
      %s202 = ssub.s32 %s11, 1
      %p203 = scmp.lt.s32.totalorder %s16, 1
      %s204 = scalar_select %p203, %s16, 1
      %s205 = smul.addr %s204, 2
      %s206 = smul.addr %s205, 8
      %s207 = scalar_lea.vmem %s0, %s206
      %p208 = pneg %p37
      %p209 = pneg %p34
      %p210 = scmp.lt.s32.totalorder %s16, 1
      %s211 = scalar_select %p210, %s16, 1
      %s212 = smul.addr %s211, 2
      %s213 = smul.addr %s212, 8
      %s214 = scalar_lea.vmem %s1, %s213
      %p215 = pneg %p63
      %p216 = pneg %p60
      %p217 = pneg %p84
      %p218 = pneg %p81
      %p219 = pneg %p105
      %p220 = pneg %p102
      %p221 = pneg %p126
      %p222 = pneg %p123
      %p223 = pneg %p152
      %p224 = pneg %p149
      %p225 = scmp.lt.s32.totalorder %s16, 1
      %s226 = scalar_select %p225, %s16, 1
      %s227 = smul.addr %s226, 3
      %s228 = smul.addr %s227, 8
      %s229 = scalar_lea.vmem %s5, %s228
      %p230 = scmp.lt.s32.totalorder %s16, 1
      %s231 = scalar_select %p230, %s16, 1
      %s232 = smul.addr %s231, 2
      %s233 = smul.addr %s232, 8
      %s234 = scalar_lea.vmem %s0, %s233
      %p235 = scmp.lt.s32.totalorder %s16, 1
      %s236 = scalar_select %p235, %s16, 1
      %s237 = smul.addr %s236, 2
      %s238 = smul.addr %s237, 8
      %s239 = scalar_lea.vmem %s1, %s238
      %p240 = scmp.lt.s32.totalorder %s16, 1
      %s241 = scalar_select %p240, %s16, 1
      %s242 = smul.addr %s241, 3
      %s243 = smul.addr %s242, 8
      %s244 = scalar_lea.vmem %s5, %s243
      %v245 = vld [vmem:[%s234] sm:$0xff]
      %v246 = vld [vmem:[%s234 + $0x8] sm:$0xff]
      %v247 = vld [vmem:[%s239] sm:$0xff]
      %v248 = vld [vmem:[%s239 + $0x8] sm:$0xff]
      %v249 = vsub.f32 %v245, %v247
      %v250 = vsub.f32 %v246, %v248
      %v251 = vand.u32 2147483647, %v249
      %v252 = vand.u32 2147483647, %v250
      %vm253 = vcmask 523264
      %v254 = vsel %vm253, %v251, 0.0
      %v255 = vsel %vm253, %v252, 0.0
      %v256 = vadd.f32 %v254, %v255
      %257 = vadd.xlane.f32.xlu0 %v256
      %v258 = vpop.xlane.xlu0 %257
      %v259 = vrot.slane %v258, 4
      %v260 = vadd.f32 %v258, %v259
      %v261 = vrot.slane %v260, 2
      %v262 = vadd.f32 %v260, %v261
      %v263 = vrot.slane %v262, 1
      %v264 = vadd.f32 %v262, %v263
      %s265 = vtos %v264
      %v266 = vmul.f32 %v245, %v245
      %v267 = vmul.f32 %v246, %v246
      %v268 = vmul.f32 %v247, %v247
      %v269 = vmul.f32 %v248, %v248
      %v270 = vmul.f32 %v245, %v247
      %v271 = vmul.f32 %v246, %v248
      %v272 = vld [vmem:[%s3] sm:$0xff]
      %v273 = vld [vmem:[%s3 + $0x8] sm:$0xff]
      %v274 = vld [vmem:[%s3 + $0x10] sm:$0xff]
      %v275 = vld [vmem:[%s3 + $0x18] sm:$0xff]
      %v276 = vld [vmem:[%s3 + $0x20] sm:$0xff]
      %v277 = vld [vmem:[%s3 + $0x28] sm:$0xff]
      %v278 = vld [vmem:[%s3 + $0x30] sm:$0xff]
      %v279 = vld [vmem:[%s3 + $0x38] sm:$0xff]
      %v281 = vsel %vm253, %v245, 0
      %v284 = vsel %vm253, %v246, 0
      %v287 = vsel %vm253, %v247, 0
      %v290 = vsel %vm253, %v248, 0
      %v293 = vsel %vm253, %v266, 0
      %v296 = vsel %vm253, %v267, 0
      %v299 = vsel %vm253, %v268, 0
      %v302 = vsel %vm253, %v269, 0
      %v305 = vsel %vm253, %v270, 0
      %v308 = vsel %vm253, %v271, 0
      %310 = vmatpush.msra.mxu0 0.0
      %311 = vmatpush.msra.mxu0 0.0
      %312 = vmatpush.msra.mxu0 0.0
      %313 = vmatpush.msra.mxu0 0.0
      %314 = vmatpush.msra.mxu0 0.0
      %315 = vmatpush.msra.mxu0 0.0
      %316 = vmatpush.msra.mxu0 0.0
      %317 = vmatpush.msra.mxu0 0.0
      %318 = vmatpush.msra.mxu0 %v279
      %319 = vmatpush.msra.mxu0 %v278
      %320 = vmatpush.msra.mxu0 %v277
      %321 = vmatpush.msra.mxu0 %v276
      %322 = vmatpush.msra.mxu0 %v275
      %323 = vmatpush.msra.mxu0 %v274
      %324 = vmatpush.msra.mxu0 %v273
      %325 = vmatpush.msra.mxu0 %v272
      %326 = vmatmul.f32.gmra.mxu0 %v281
      %v327 = vpop.f32.mrf.mxu0
      %v328 = vadd.f32 0.0, %v327
      %329 = vmatmul.f32.gmra.mxu0 %v284
      %v330 = vpop.f32.mrf.mxu0
      %v331 = vadd.f32 0.0, %v330
      %332 = vmatmul.f32.gmra.mxu0 %v287
      %v333 = vpop.f32.mrf.mxu0
      %v334 = vadd.f32 0.0, %v333
      %335 = vmatmul.f32.gmra.mxu0 %v290
      %v336 = vpop.f32.mrf.mxu0
      %v337 = vadd.f32 0.0, %v336
      %338 = vmatmul.f32.gmra.mxu0 %v293
      %v339 = vpop.f32.mrf.mxu0
      %v340 = vadd.f32 0.0, %v339
      %341 = vmatmul.f32.gmra.mxu0 %v296
      %v342 = vpop.f32.mrf.mxu0
      %v343 = vadd.f32 0.0, %v342
      %344 = vmatmul.f32.gmra.mxu0 %v299
      %v345 = vpop.f32.mrf.mxu0
      %v346 = vadd.f32 0.0, %v345
      %347 = vmatmul.f32.gmra.mxu0 %v302
      %v348 = vpop.f32.mrf.mxu0
      %v349 = vadd.f32 0.0, %v348
      %350 = vmatmul.f32.gmra.mxu0 %v305
      %v351 = vpop.f32.mrf.mxu0
      %v352 = vadd.f32 0.0, %v351
      %353 = vmatmul.f32.gmra.mxu0 %v308
      %v354 = vpop.f32.mrf.mxu0
      %v355 = vadd.f32 0.0, %v354
      %356 = vdwg.mxu0
      %v357 = vld [vmem:[%s2] sm:$0xff]
      %v358 = vld [vmem:[%s2 + $0x8] sm:$0xff]
      %v359 = vld [vmem:[%s2 + $0x10] sm:$0xff]
      %v360 = vld [vmem:[%s2 + $0x18] sm:$0xff]
      %v361 = vld [vmem:[%s2 + $0x20] sm:$0xff]
      %v362 = vld [vmem:[%s2 + $0x28] sm:$0xff]
      %v363 = vld [vmem:[%s2 + $0x30] sm:$0xff]
      %v364 = vld [vmem:[%s2 + $0x38] sm:$0xff]
      %v365 = vld [vmem:[%s2 + $0x40] sm:$0xff]
      %v366 = vld [vmem:[%s2 + $0x48] sm:$0xff]
      %vm367 = vcmask 654336
      %v369 = vsel %vm367, %v357, 0
      %v372 = vsel %vm367, %v358, 0
      %v375 = vsel %vm367, %v359, 0
      %v378 = vsel %vm367, %v360, 0
      %v381 = vsel %vm367, %v361, 0
      %v384 = vsel %vm367, %v362, 0
      %v387 = vsel %vm367, %v363, 0
      %v390 = vsel %vm367, %v364, 0
      %v393 = vsel %vm367, %v365, 0
      %v396 = vsel %vm367, %v366, 0
      %398 = vmatpush.msra.mxu0 0.0
      %399 = vmatpush.msra.mxu0 0.0
      %400 = vmatpush.msra.mxu0 0.0
      %401 = vmatpush.msra.mxu0 0.0
      %402 = vmatpush.msra.mxu0 0.0
      %403 = vmatpush.msra.mxu0 0.0
      %404 = vmatpush.msra.mxu0 %v355
      %405 = vmatpush.msra.mxu0 %v352
      %406 = vmatpush.msra.mxu0 %v349
      %407 = vmatpush.msra.mxu0 %v346
      %408 = vmatpush.msra.mxu0 %v343
      %409 = vmatpush.msra.mxu0 %v340
      %410 = vmatpush.msra.mxu0 %v337
      %411 = vmatpush.msra.mxu0 %v334
      %412 = vmatpush.msra.mxu0 %v331
      %413 = vmatpush.msra.mxu0 %v328
      %414 = vmatmul.f32.gmra.mxu0 %v369
      %v415 = vpop.f32.mrf.mxu0
      %v416 = vadd.f32 0.0, %v415
      %417 = vmatmul.f32.gmra.mxu0 %v372
      %v418 = vpop.f32.mrf.mxu0
      %v419 = vadd.f32 0.0, %v418
      %420 = vmatmul.f32.gmra.mxu0 %v375
      %v421 = vpop.f32.mrf.mxu0
      %v422 = vadd.f32 0.0, %v421
      %423 = vmatmul.f32.gmra.mxu0 %v378
      %v424 = vpop.f32.mrf.mxu0
      %v425 = vadd.f32 0.0, %v424
      %426 = vmatmul.f32.gmra.mxu0 %v381
      %v427 = vpop.f32.mrf.mxu0
      %v428 = vadd.f32 0.0, %v427
      %429 = vmatmul.f32.gmra.mxu0 %v384
      %v430 = vpop.f32.mrf.mxu0
      %v431 = vadd.f32 0.0, %v430
      %432 = vmatmul.f32.gmra.mxu0 %v387
      %v433 = vpop.f32.mrf.mxu0
      %v434 = vadd.f32 0.0, %v433
      %435 = vmatmul.f32.gmra.mxu0 %v390
      %v436 = vpop.f32.mrf.mxu0
      %v437 = vadd.f32 0.0, %v436
      %438 = vmatmul.f32.gmra.mxu0 %v393
      %v439 = vpop.f32.mrf.mxu0
      %v440 = vadd.f32 0.0, %v439
      %441 = vmatmul.f32.gmra.mxu0 %v396
      %v442 = vpop.f32.mrf.mxu0
      %v443 = vadd.f32 0.0, %v442
      %444 = vdwg.mxu0
      %v445 = vmul.f32 %v416, %v416
      %v446 = vmul.f32 %v419, %v419
      %v447 = vmul.f32 %v422, %v422
      %v448 = vmul.f32 %v425, %v425
      %v449 = vmul.f32 %v416, %v422
      %v450 = vmul.f32 %v419, %v425
      %v451 = vsub.f32 %v428, %v445
      %v452 = vsub.f32 %v431, %v446
      %v453 = vsub.f32 %v434, %v447
      %v454 = vsub.f32 %v437, %v448
      %v455 = vsub.f32 %v440, %v449
      %v456 = vsub.f32 %v443, %v450
      %v457 = vmul.f32 %v449, 2.0
      %v458 = vmul.f32 %v450, 2.0
      %v459 = vadd.f32 %v457, 0.0001
      %v460 = vadd.f32 %v458, 0.0001
      %v461 = vmul.f32 %v455, 2.0
      %v462 = vmul.f32 %v456, 2.0
      %v463 = vadd.f32 %v461, 0.0009
      %v464 = vadd.f32 %v462, 0.0009
      %v465 = vmul.f32 %v459, %v463
      %v466 = vmul.f32 %v460, %v464
      %v467 = vadd.f32 %v445, %v447
      %v468 = vadd.f32 %v446, %v448
      %v469 = vadd.f32 %v467, 0.0001
      %v470 = vadd.f32 %v468, 0.0001
      %v471 = vadd.f32 %v451, %v453
      %v472 = vadd.f32 %v452, %v454
      %v473 = vadd.f32 %v471, 0.0009
      %v474 = vadd.f32 %v472, 0.0009
      %v475 = vmul.f32 %v469, %v473
      %v476 = vmul.f32 %v470, %v474
      %v477 = vrcp.pop %v475
      %v478 = vrcp.pop %v476
      %v479 = vmul.f32 %v465, %v477
      %v480 = vmul.f32 %v466, %v478
      %v481 = vsel %vm253, %v479, 0.0
      %v482 = vsel %vm253, %v480, 0.0
      %v483 = vadd.f32 %v481, %v482
      %484 = vadd.xlane.f32.xlu0 %v483
      %v485 = vpop.xlane.xlu0 %484
      %v486 = vrot.slane %v485, 4
      %v487 = vadd.f32 %v485, %v486
      %v488 = vrot.slane %v487, 2
      %v489 = vadd.f32 %v487, %v488
      %v490 = vrot.slane %v489, 1
      %v491 = vadd.f32 %v489, %v490
      %s492 = vtos %v491
      %v493 = vld [vmem:[%s4] sm:$0xff]
      %v494 = vld [vmem:[%s4 + $0x8] sm:$0xff]
      %v495 = vld [vmem:[%s4 + $0x10] sm:$0xff]
      %v496 = vld [vmem:[%s4 + $0x18] sm:$0xff]
      %v497 = vld [vmem:[%s4 + $0x20] sm:$0xff]
      %v498 = vld [vmem:[%s4 + $0x28] sm:$0xff]
      %v499 = vld [vmem:[%s4 + $0x30] sm:$0xff]
      %v500 = vld [vmem:[%s4 + $0x38] sm:$0xff]
      %501 = vmatpush.msra.mxu0 0.0
      %502 = vmatpush.msra.mxu0 0.0
      %503 = vmatpush.msra.mxu0 0.0
      %504 = vmatpush.msra.mxu0 0.0
      %505 = vmatpush.msra.mxu0 0.0
      %506 = vmatpush.msra.mxu0 0.0
      %507 = vmatpush.msra.mxu0 0.0
      %508 = vmatpush.msra.mxu0 0.0
      %509 = vmatpush.msra.mxu0 %v500
      %510 = vmatpush.msra.mxu0 %v499
      %511 = vmatpush.msra.mxu0 %v498
      %512 = vmatpush.msra.mxu0 %v497
      %513 = vmatpush.msra.mxu0 %v496
      %514 = vmatpush.msra.mxu0 %v495
      %515 = vmatpush.msra.mxu0 %v494
      %516 = vmatpush.msra.mxu0 %v493
      %517 = vmatmul.f32.gmra.mxu0 %v281
      %v518 = vpop.f32.mrf.mxu0
      %v519 = vadd.f32 0.0, %v518
      %520 = vmatmul.f32.gmra.mxu0 %v284
      %v521 = vpop.f32.mrf.mxu0
      %v522 = vadd.f32 0.0, %v521
      %523 = vmatmul.f32.gmra.mxu0 %v287
      %v524 = vpop.f32.mrf.mxu0
      %v525 = vadd.f32 0.0, %v524
      %526 = vmatmul.f32.gmra.mxu0 %v290
      %v527 = vpop.f32.mrf.mxu0
      %v528 = vadd.f32 0.0, %v527
      %529 = vdwg.mxu0
      %v530 = vand.u32 2147483647, %v519
      %v531 = vand.u32 2147483647, %v522
      %v532 = vand.u32 2147483647, %v525
      %v533 = vand.u32 2147483647, %v528
      %v534 = vsub.f32 %v530, %v532
      %v535 = vsub.f32 %v531, %v533
      %v536 = vmul.f32 %v534, %v534
      %v537 = vmul.f32 %v535, %v535
      %v538 = vsel %vm253, %v536, 0.0
      %v539 = vsel %vm253, %v537, 0.0
      %v540 = vadd.f32 %v538, %v539
      %541 = vadd.xlane.f32.xlu0 %v540
      %v542 = vpop.xlane.xlu0 %541
      %v543 = vrot.slane %v542, 4
      %v544 = vadd.f32 %v542, %v543
      %v545 = vrot.slane %v544, 2
      %v546 = vadd.f32 %v544, %v545
      %v547 = vrot.slane %v546, 1
      %v548 = vadd.f32 %v546, %v547
      %s549 = vtos %v548
      %v550 = vstv %s265
      %551 = vst [vmem:[%s244] sm:$0xff] %v550
      %v552 = vstv %s492
      %s553 = scalar_lea.vmem %s244, 8
      %554 = vst [vmem:[%s553] sm:$0xff] %v552
      %v555 = vstv %s549
      %s556 = scalar_lea.vmem %s244, 16
      %557 = vst [vmem:[%s556] sm:$0xff] %v555
      %p558 = scmp.lt.s32.totalorder %s16, 1
      %s559 = scalar_select %p558, %s16, 1
      %s560 = smul.addr %s559, 3
      %s561 = smul.addr %s560, 8
      %s562 = scalar_lea.vmem %s5, %s561
      // Predicated region
      $region41: #{multi_contrast_loss.1} parent=39 // pred_check
        %p563 = pneg %p149
      $region42: #{multi_contrast_loss.1} parent=39 // pred_check_branch
        %565 = sbr.rel (%p563) target = $region44
      $region43: #{multi_contrast_loss.1} parent=39 // pred_region
        _
      $region44: #{multi_contrast_loss.1} parent=39 // pred_fallthru
        _
    $region40: #{multi_contrast_loss.1} parent=5 // pred_fallthru
      _
    %p566 = scmp.le.s32.totalorder 2, %s11
    // Predicated region
    $region45: #{multi_contrast_loss.1} parent=5 // pred_check
      %p567 = pneg %p566
    $region46: #{multi_contrast_loss.1} parent=5 // pred_check_branch
      %569 = sbr.rel (%p567) target = $region48
    $region47: #{multi_contrast_loss.1} parent=5 // pred_region
      %s570 = ssub.s32 %s11, 2
      // Predicated region
      $region49: #{multi_contrast_loss.1} parent=47 // pred_check
        %p571 = pneg %p155
      $region50: #{multi_contrast_loss.1} parent=47 // pred_check_branch
        %573 = sbr.rel (%p571) target = $region52
      $region51: #{multi_contrast_loss.1} parent=47 // pred_region
        %p574 = scmp.lt.s32.totalorder %s17, 1
        %s575 = scalar_select %p574, %s17, 1
        %s576 = smul.addr %s575, 3
        %s577 = smul.addr %s576, 8
        %s578 = scalar_lea.vmem %s5, %s577
      $region52: #{multi_contrast_loss.1} parent=47 // pred_fallthru
        _
    $region48: #{multi_contrast_loss.1} parent=5 // pred_fallthru
      _
  $region6: #{multi_contrast_loss.1} parent=0 // loop_footer
    %s15 = sadd.s32 1, %s11
  $region7: #{multi_contrast_loss.1} parent=0 // loop_footer_branch
    %10 = sbr.rel target = $region3
  $region8: #{multi_contrast_loss.1} parent=0 // loop_exit
    _

</llo_original>
